<compile_context>
chip_gen: v6e
topology: v6e:2x2x1
jax: 0.10.0
libtpu: 0.0.40
codegen_flags: <defaults>
</compile_context>

<pallas_src>
import math
import functools

import jax
import jax.numpy as jnp
from jax.experimental import pallas as pl
from jax.experimental.pallas import tpu as pltpu


def _round_up(x, m):
    return ((x + m - 1) // m) * m


# --------------------------------------------------------------------------
# Pallas kernel: rank-1 conv as (1, KK) x (KK, LT) matmul + OC broadcast + bias
# --------------------------------------------------------------------------
def _rank1_conv_kernel(w_ref, p_ref, b_ref, o_ref):
    # w_ref: (1, KK)    -- flattened K*K kernel (single row; rank-1 weight)
    # p_ref: (KK, LT)   -- channel-summed im2col patches, lane tile LT
    # b_ref: (OC, 1)    -- per-output-channel bias
    # o_ref: (OC, LT)
    row = jnp.dot(w_ref[...], p_ref[...],
                  preferred_element_type=jnp.float32)          # (1, LT) on MXU
    oc, lt = o_ref.shape
    o_ref[...] = (jnp.broadcast_to(row, (oc, lt)) + b_ref[...]).astype(o_ref.dtype)


def _pallas_rank1_conv(w_row, patches, bias, *, lane_tile):
    KK, Lp = patches.shape
    OC = bias.shape[0]
    bias2d = bias.reshape(OC, 1)
    grid = (Lp // lane_tile,)

    return pl.pallas_call(
        _rank1_conv_kernel,
        out_shape=jax.ShapeDtypeStruct((OC, Lp), jnp.float32),
        grid_spec=pltpu.PrefetchScalarGridSpec(
            num_scalar_prefetch=0,
            grid=grid,
            in_specs=[
                pl.BlockSpec((1, KK), lambda t: (0, 0)),
                pl.BlockSpec((KK, lane_tile), lambda t: (0, t)),
                pl.BlockSpec((OC, 1), lambda t: (0, 0)),
            ],
            out_specs=pl.BlockSpec((OC, lane_tile), lambda t: (0, t)),
        ),
        compiler_params=pltpu.CompilerParams(
            dimension_semantics=("parallel",),
            vmem_limit_bytes=32 * 1024 * 1024,   # explicit; tiny blocks, v7x-safe
        ),
    )(w_row, patches, bias2d)


# --------------------------------------------------------------------------
# Wrapper-side patch extraction on the CHANNEL-SUMMED image (rank-1 structure)
# --------------------------------------------------------------------------
def _im2col_channel_summed(x, K, stride, padding, dilation):
    """Return (K*K, N*L) patches of sum_c x[:, c] with (kh, kw) row-major order."""
    N, C, H, W = x.shape
    xs = jnp.sum(x, axis=1)                                     # (N, H, W)
    xp = jnp.pad(xs, ((0, 0), (padding, padding), (padding, padding)))
    oh = (H + 2 * padding - dilation * (K - 1) - 1) // stride + 1
    ow = (W + 2 * padding - dilation * (K - 1) - 1) // stride + 1
    rows = []
    for i in range(K):
        for j in range(K):
            patch = xp[:, i * dilation: i * dilation + stride * oh: stride,
                          j * dilation: j * dilation + stride * ow: stride]
            rows.append(patch.reshape(N * oh * ow))
    return jnp.stack(rows, axis=0), oh, ow                      # (K*K, N*L)


class MyConvPallas:
    """JAX/Pallas re-implementation of the PyTorch MyConv module."""

    def __init__(self, in_channels, out_channels, kernel_size,
                 stride=1, padding=0, dilation=1, *, key):
        self.in_channels = in_channels
        self.out_channels = out_channels
        self.kernel_size = kernel_size
        self.stride = stride
        self.padding = padding
        self.dilation = dilation

        k_key, b_key = jax.random.split(key)
        # kaiming_uniform_(a=sqrt(5)) on a (K, K) tensor: fan_in=K, bound=1/sqrt(K).
        bound = 1.0 / math.sqrt(kernel_size)
        self.conv = jax.random.uniform(
            k_key, (kernel_size, kernel_size), jnp.float32,
            minval=-bound, maxval=bound)
        # nn.init.uniform_ default is U(0, 1).
        self.bias = jax.random.uniform(
            b_key, (out_channels,), jnp.float32, minval=0.0, maxval=1.0)

    @functools.partial(jax.jit, static_argnums=0)
    def __call__(self, x):
        N, C, H, W = x.shape
        K = self.kernel_size
        s, p, d = self.stride, self.padding, self.dilation

        # Output spatial size exactly as the PyTorch module (ignores dilation),
        # but with integer floor-div.
        out_H = (H + 2 * p - K) // s + 1
        out_W = (W + 2 * p - K) // s + 1

        patches, oh, ow = _im2col_channel_summed(x, K, s, p, d)
        if oh * ow != out_H * out_W:
            raise ValueError(
                "unfold length (dilation-aware) does not match the module's "
                "out_H*out_W formula; the reference .view would be inconsistent")

        NL = N * out_H * out_W
        # Lane-dense, 128-aligned lane dim; tile it (<=2048 lanes) for big inputs.
        lane_tile = min(_round_up(NL, 128), 2048)
        Lp = _round_up(NL, lane_tile)
        patches_p = jnp.pad(patches, ((0, 0), (0, Lp - NL)))

        w_row = self.conv.reshape(1, K * K)                     # rank-1 weight row
        out_flat = _pallas_rank1_conv(w_row, patches_p, self.bias,
                                      lane_tile=lane_tile)      # (OC, Lp)

        out = out_flat[:, :NL].reshape(self.out_channels, N, out_H, out_W)
        return jnp.transpose(out, (1, 0, 2, 3))                 # (N, OC, oH, oW)


# --------------------------------------------------------------------------
# Pure-JAX reference mirroring the PyTorch forward step by step (full W, cols)
# --------------------------------------------------------------------------
def _unfold_nchw(x, K, stride, padding, dilation):
    N, C, H, W = x.shape
    xp = jnp.pad(x, ((0, 0), (0, 0), (padding, padding), (padding, padding)))
    oh = (H + 2 * padding - dilation * (K - 1) - 1) // stride + 1
    ow = (W + 2 * padding - dilation * (K - 1) - 1) // stride + 1
    cols = []
    for c in range(C):
        for i in range(K):
            for j in range(K):
                patch = xp[:, c,
                           i * dilation: i * dilation + stride * oh: stride,
                           j * dilation: j * dilation + stride * ow: stride]
                cols.append(patch.reshape(N, oh * ow))
    return jnp.stack(cols, axis=1)                              # (N, C*K*K, L)


def _reference_forward(module, x):
    N, C, H, W = x.shape
    K = module.kernel_size
    cols = _unfold_nchw(x, K, module.stride, module.padding, module.dilation)
    conv_flat = module.conv.reshape(K * K)
    conv_unfold = jnp.concatenate([conv_flat] * module.in_channels, axis=0)
    w_mat = jnp.stack([conv_unfold] * module.out_channels, axis=0)
    out = jnp.einsum('ok,nkl->nol', w_mat, cols)
    out_H = (H + 2 * module.padding - K) // module.stride + 1
    out_W = (W + 2 * module.padding - K) // module.stride + 1
    out = out.reshape(-1, module.out_channels, out_H, out_W)
    return out + module.bias.reshape(module.out_channels, 1, 1)


if __name__ == "__main__":
    key = jax.random.PRNGKey(0)
    p_key, x_key = jax.random.split(key)

    in_channels, out_channels, kernel_size = 4, 8, 3
    module = MyConvPallas(in_channels, out_channels, kernel_size,
                          stride=1, padding=0, dilation=1, key=p_key)

    x = jax.random.normal(x_key, (2, in_channels, 16, 16), jnp.float32)

    out = jax.block_until_ready(module(x))

    ref = _reference_forward(module, x)
    assert out.shape == (2, out_channels, 14, 14), out.shape
    assert jnp.allclose(out, ref, atol=1e-4, rtol=1e-4), "mismatch vs reference"

    print("KERNEL_OK")
</pallas_src>

<mosaic_0001>
module attributes {stable_mosaic.version = 11 : i64} {
  func.func @_rank1_conv_kernel(%arg0: i32, %arg1: memref<1x9xf32, #tpu.memory_space<vmem>>, %arg2: memref<9x512xf32, #tpu.memory_space<vmem>>, %arg3: memref<8x1xf32, #tpu.memory_space<vmem>>, %arg4: memref<8x512xf32, #tpu.memory_space<vmem>>) attributes {dimension_semantics = [#tpu.dimension_semantics<parallel>], iteration_bounds = array<i64: 1>, scalar_prefetch = 0 : i64, scratch_operands = 0 : i64, tpu.core_type = #tpu.core_type<tc>, window_params = [{pipeline_mode = #tpu.pipeline_mode<synchronous>, transform_indices = @transform_0, window_bounds = array<i64: 1, 9>}, {transform_indices = @transform_1, window_bounds = array<i64: 9, 512>}, {pipeline_mode = #tpu.pipeline_mode<synchronous>, transform_indices = @transform_2, window_bounds = array<i64: 8, 1>}, {transform_indices = @transform_3, window_bounds = array<i64: 8, 512>}]} {
    %c0 = arith.constant 0 : index
    %c0_0 = arith.constant 0 : index
    %0 = vector.load %arg1[%c0, %c0_0] : memref<1x9xf32, #tpu.memory_space<vmem>>, vector<1x9xf32>
    %c0_1 = arith.constant 0 : index
    %c0_2 = arith.constant 0 : index
    %1 = vector.load %arg2[%c0_1, %c0_2] : memref<9x512xf32, #tpu.memory_space<vmem>>, vector<9x512xf32>
    %cst = arith.constant dense<0.000000e+00> : vector<1x512xf32>
    %2 = tpu.matmul %0, %1, %cst {dimension_numbers = #tpu.dot_dimension_numbers<[1], [0], [0], [1], [0, 0, 1, 1], [], []>} : vector<1x9xf32>, vector<9x512xf32>, vector<1x512xf32> -> vector<1x512xf32>
    %3 = vector.shape_cast %2 : vector<1x512xf32> to vector<1x512xf32>
    %4 = vector.broadcast %3 : vector<1x512xf32> to vector<8x512xf32>
    %c0_3 = arith.constant 0 : index
    %c0_4 = arith.constant 0 : index
    %5 = vector.load %arg3[%c0_3, %c0_4] : memref<8x1xf32, #tpu.memory_space<vmem>>, vector<8x1xf32>
    %6 = vector.broadcast %5 : vector<8x1xf32> to vector<8x512xf32>
    %7 = arith.addf %4, %6 : vector<8x512xf32>
    %c0_5 = arith.constant 0 : index
    %c0_6 = arith.constant 0 : index
    %8 = vector.load %arg4[%c0_5, %c0_6] : memref<8x512xf32, #tpu.memory_space<vmem>>, vector<8x512xf32>
    tpu.vector_store %arg4[%c0_5, %c0_6], %7 {strides = array<i32>} : memref<8x512xf32, #tpu.memory_space<vmem>>, vector<8x512xf32>,
    return
  }
  func.func @transform_0(%arg0: i32) -> (i32, i32) {
    %c0_i32 = arith.constant 0 : i32
    %c0_i32_0 = arith.constant 0 : i32
    %c0_i32_1 = arith.constant 0 : i32
    return %c0_i32, %c0_i32_0 : i32, i32
  }
  func.func @transform_1(%arg0: i32) -> (i32, i32) {
    %c0_i32 = arith.constant 0 : i32
    %c0_i32_0 = arith.constant 0 : i32
    return %c0_i32, %arg0 : i32, i32
  }
  func.func @transform_2(%arg0: i32) -> (i32, i32) {
    %c0_i32 = arith.constant 0 : i32
    %c0_i32_0 = arith.constant 0 : i32
    %c0_i32_1 = arith.constant 0 : i32
    return %c0_i32, %c0_i32_0 : i32, i32
  }
  func.func @transform_3(%arg0: i32) -> (i32, i32) {
    %c0_i32 = arith.constant 0 : i32
    %c0_i32_0 = arith.constant 0 : i32
    return %c0_i32, %arg0 : i32, i32
  }
}

</mosaic_0001>

<llo_original>
// kernel: a_call__.1
$region0: #{a_call__.1}
  #allocation0 [shape = 'u32[]', space=smem, size = 0x4, offset = 0x4, fixed_abs, tag = 'smem constant byte address 0x4 - core index']
  #allocation1 [shape = 'u32[144,128]{1,0:T(1,128)}', space=vmem, size = 0x12000, scoped, tag = 'internal scratch']
  %s0 = inlined_call_operand.vmem [shape: f32[1,9], index: 0, kind: input, shape index: {}]
  %s1 = inlined_call_operand.vmem [shape: f32[9,512], index: 1, kind: input, shape index: {}]
  %s2 = inlined_call_operand.vmem [shape: f32[8,1], index: 2, kind: input, shape index: {}]
  %s3 = inlined_call_operand.vmem [shape: f32[8,512], index: 3, kind: output, shape index: {}]
  %s4 = sld [smem:[#allocation0]]
  $region22: #{a_call__.1} parent=0
    _
  %s6 = ssub.s32 1, %s4
  %s7 = scalar_select 0, %s6, %s4
  // Predicated region
  $region2: #{a_call__.1} parent=0 // pred_check
    _
  $region3: #{a_call__.1} parent=0 // pred_check_branch
    %9 = sbr.rel (0) target = $region5
  $region4: #{a_call__.1} parent=0 // pred_region
    _
  $region5: #{a_call__.1} parent=0 // pred_fallthru
    _
  // Predicated region
  $region6: #{a_call__.1} parent=0 // pred_check
    _
  $region7: #{a_call__.1} parent=0 // pred_check_branch
    %11 = sbr.rel (0) target = $region9
  $region8: #{a_call__.1} parent=0 // pred_region
    _
  $region9: #{a_call__.1} parent=0 // pred_fallthru
    _
  // Predicated region
  $region10: #{a_call__.1} parent=0 // pred_check
    _
  $region11: #{a_call__.1} parent=0 // pred_check_branch
    %13 = sbr.rel (0) target = $region13
  $region12: #{a_call__.1} parent=0 // pred_region
    _
  $region13: #{a_call__.1} parent=0 // pred_fallthru
    _
  %v14 = vld [vmem:[%s0] sm:$0x1]
  %v15 = vld [vmem:[%s1] sm:$0xff]
  %v16 = vld [vmem:[%s1 + $0x8] sm:$0xff]
  %v17 = vld [vmem:[%s1 + $0x10] sm:$0xff]
  %v18 = vld [vmem:[%s1 + $0x18] sm:$0xff]
  %v19 = vld [vmem:[%s1 + $0x20] sm:$0x1]
  %v20 = vld [vmem:[%s1 + $0x28] sm:$0x1]
  %v21 = vld [vmem:[%s1 + $0x30] sm:$0x1]
  %v22 = vld [vmem:[%s1 + $0x38] sm:$0x1]
  %vm23 = vcmask 72704
  %v25 = vsel %vm23, %v14, 0
  %vm27 = vcmask 1040384
  %v29 = vsel %vm27, %v19, 0
  %v32 = vsel %vm27, %v20, 0
  %v35 = vsel %vm27, %v21, 0
  %v38 = vsel %vm27, %v22, 0
  %40 = vmatprep.subr.mxu0 0.0
  %41 = vmatpush1.msra.mxu0 0.0
  %42 = vmatprep.subr.mxu0 0.0
  %43 = vmatpush1.msra.mxu0 0.0
  %44 = vmatprep.subr.mxu0 0.0
  %45 = vmatpush1.msra.mxu0 0.0
  %46 = vmatprep.subr.mxu0 0.0
  %47 = vmatpush1.msra.mxu0 0.0
  %48 = vmatprep.subr.mxu0 0.0
  %49 = vmatpush1.msra.mxu0 0.0
  %50 = vmatprep.subr.mxu0 0.0
  %51 = vmatpush1.msra.mxu0 0.0
  %52 = vmatprep.subr.mxu0 0.0
  %53 = vmatpush1.msra.mxu0 0.0
  %54 = vmatprep.subr.mxu0 0.0
  %55 = vmatpush1.msra.mxu0 0.0
  %56 = vmatprep.subr.mxu0 0.0
  %57 = vmatpush1.msra.mxu0 0.0
  %58 = vmatprep.subr.mxu0 0.0
  %59 = vmatpush1.msra.mxu0 0.0
  %60 = vmatprep.subr.mxu0 0.0
  %61 = vmatpush1.msra.mxu0 0.0
  %62 = vmatprep.subr.mxu0 0.0
  %63 = vmatpush1.msra.mxu0 0.0
  %64 = vmatprep.subr.mxu0 0.0
  %65 = vmatpush1.msra.mxu0 0.0
  %66 = vmatprep.subr.mxu0 0.0
  %67 = vmatpush1.msra.mxu0 0.0
  %68 = vmatprep.subr.mxu0 %v32
  %69 = vmatpush1.msra.mxu0 %v29
  %70 = vmatprep.subr.mxu0 %v16
  %71 = vmatpush1.msra.mxu0 %v15
  %72 = vmatprep.subr.mxu0 0.0
  %73 = vmatpush2.msra.mxu0 0.0
  %74 = vmatprep.subr.mxu0 0.0
  %75 = vmatpush2.msra.mxu0 0.0
  %76 = vmatprep.subr.mxu0 0.0
  %77 = vmatpush2.msra.mxu0 0.0
  %78 = vmatprep.subr.mxu0 0.0
  %79 = vmatpush2.msra.mxu0 0.0
  %80 = vmatprep.subr.mxu0 0.0
  %81 = vmatpush2.msra.mxu0 0.0
  %82 = vmatprep.subr.mxu0 0.0
  %83 = vmatpush2.msra.mxu0 0.0
  %84 = vmatprep.subr.mxu0 0.0
  %85 = vmatpush2.msra.mxu0 0.0
  %86 = vmatprep.subr.mxu0 0.0
  %87 = vmatpush2.msra.mxu0 0.0
  %88 = vmatprep.subr.mxu0 0.0
  %89 = vmatpush2.msra.mxu0 0.0
  %90 = vmatprep.subr.mxu0 0.0
  %91 = vmatpush2.msra.mxu0 0.0
  %92 = vmatprep.subr.mxu0 0.0
  %93 = vmatpush2.msra.mxu0 0.0
  %94 = vmatprep.subr.mxu0 0.0
  %95 = vmatpush2.msra.mxu0 0.0
  %96 = vmatprep.subr.mxu0 0.0
  %97 = vmatpush2.msra.mxu0 0.0
  %98 = vmatprep.subr.mxu0 0.0
  %99 = vmatpush2.msra.mxu0 0.0
  %100 = vmatprep.subr.mxu0 0.0
  %101 = vmatpush2.msra.mxu0 0.0
  %102 = vmatprep.subr.mxu0 0.0
  %103 = vmatpush2.msra.mxu0 0.0
  %104 = vmatprep.mubr.f32.mxu0 0.0
  %105 = vmatmul.mubr.f32.gmra.mxu0 %v25
  %v106 = vpop.f32.mrf.mxu0
  %v107 = vadd.f32 0.0, %v106
  %v108 = vpop.f32.mrf.mxu0
  %v109 = vadd.f32 0.0, %v108
  %110 = vdwg.mxu0
  %111 = vmatprep.subr.mxu0 0.0
  %112 = vmatpush1.msra.mxu0 0.0
  %113 = vmatprep.subr.mxu0 0.0
  %114 = vmatpush1.msra.mxu0 0.0
  %115 = vmatprep.subr.mxu0 0.0
  %116 = vmatpush1.msra.mxu0 0.0
  %117 = vmatprep.subr.mxu0 0.0
  %118 = vmatpush1.msra.mxu0 0.0
  %119 = vmatprep.subr.mxu0 0.0
  %120 = vmatpush1.msra.mxu0 0.0
  %121 = vmatprep.subr.mxu0 0.0
  %122 = vmatpush1.msra.mxu0 0.0
  %123 = vmatprep.subr.mxu0 0.0
  %124 = vmatpush1.msra.mxu0 0.0
  %125 = vmatprep.subr.mxu0 0.0
  %126 = vmatpush1.msra.mxu0 0.0
  %127 = vmatprep.subr.mxu0 0.0
  %128 = vmatpush1.msra.mxu0 0.0
  %129 = vmatprep.subr.mxu0 0.0
  %130 = vmatpush1.msra.mxu0 0.0
  %131 = vmatprep.subr.mxu0 0.0
  %132 = vmatpush1.msra.mxu0 0.0
  %133 = vmatprep.subr.mxu0 0.0
  %134 = vmatpush1.msra.mxu0 0.0
  %135 = vmatprep.subr.mxu0 0.0
  %136 = vmatpush1.msra.mxu0 0.0
  %137 = vmatprep.subr.mxu0 0.0
  %138 = vmatpush1.msra.mxu0 0.0
  %139 = vmatprep.subr.mxu0 %v38
  %140 = vmatpush1.msra.mxu0 %v35
  %141 = vmatprep.subr.mxu0 %v18
  %142 = vmatpush1.msra.mxu0 %v17
  %143 = vmatprep.subr.mxu0 0.0
  %144 = vmatpush2.msra.mxu0 0.0
  %145 = vmatprep.subr.mxu0 0.0
  %146 = vmatpush2.msra.mxu0 0.0
  %147 = vmatprep.subr.mxu0 0.0
  %148 = vmatpush2.msra.mxu0 0.0
  %149 = vmatprep.subr.mxu0 0.0
  %150 = vmatpush2.msra.mxu0 0.0
  %151 = vmatprep.subr.mxu0 0.0
  %152 = vmatpush2.msra.mxu0 0.0
  %153 = vmatprep.subr.mxu0 0.0
  %154 = vmatpush2.msra.mxu0 0.0
  %155 = vmatprep.subr.mxu0 0.0
  %156 = vmatpush2.msra.mxu0 0.0
  %157 = vmatprep.subr.mxu0 0.0
  %158 = vmatpush2.msra.mxu0 0.0
  %159 = vmatprep.subr.mxu0 0.0
  %160 = vmatpush2.msra.mxu0 0.0
  %161 = vmatprep.subr.mxu0 0.0
  %162 = vmatpush2.msra.mxu0 0.0
  %163 = vmatprep.subr.mxu0 0.0
  %164 = vmatpush2.msra.mxu0 0.0
  %165 = vmatprep.subr.mxu0 0.0
  %166 = vmatpush2.msra.mxu0 0.0
  %167 = vmatprep.subr.mxu0 0.0
  %168 = vmatpush2.msra.mxu0 0.0
  %169 = vmatprep.subr.mxu0 0.0
  %170 = vmatpush2.msra.mxu0 0.0
  %171 = vmatprep.subr.mxu0 0.0
  %172 = vmatpush2.msra.mxu0 0.0
  %173 = vmatprep.subr.mxu0 0.0
  %174 = vmatpush2.msra.mxu0 0.0
  %175 = vmatprep.mubr.f32.mxu0 0.0
  %176 = vmatmul.mubr.f32.gmra.mxu0 %v25
  %v177 = vpop.f32.mrf.mxu0
  %v178 = vadd.f32 0.0, %v177
  %v179 = vpop.f32.mrf.mxu0
  %v180 = vadd.f32 0.0, %v179
  %181 = vdwg.mxu0
  %v182 = vlaneseq
  %v183 = vshrl.u32 %v182, 7
  %v184 = vsub.s32 0, %v183
  %v185 = vrot.slane %v107, %v184
  %v186 = vlaneseq
  %v187 = vshrl.u32 %v186, 7
  %v188 = vsub.s32 0, %v187
  %v189 = vrot.slane %v109, %v188
  %v190 = vlaneseq
  %v191 = vshrl.u32 %v190, 7
  %v192 = vsub.s32 0, %v191
  %v193 = vrot.slane %v178, %v192
  %v194 = vlaneseq
  %v195 = vshrl.u32 %v194, 7
  %v196 = vsub.s32 0, %v195
  %v197 = vrot.slane %v180, %v196
  %v198 = vld [vmem:[%s2] sm:$0xff]
  %200 = vset.pattern.permute.xlu0 0
  %201 = vperm.xlu0 %200, %v198
  %v202 = vpop.permute.xlu0 %201
  %v204 = vadd.f32 %v185, %v202
  %v205 = vadd.f32 %v189, %v202
  %v206 = vadd.f32 %v193, %v202
  %v207 = vadd.f32 %v197, %v202
  %208 = vst [vmem:[%s3] sm:$0xff] %v204
  %209 = vst [vmem:[%s3 + $0x8] sm:$0xff] %v205
  %210 = vst [vmem:[%s3 + $0x10] sm:$0xff] %v206
  %211 = vst [vmem:[%s3 + $0x18] sm:$0xff] %v207
  // Predicated region
  $region14: #{a_call__.1} parent=0 // pred_check
    _
  $region15: #{a_call__.1} parent=0 // pred_check_branch
    %213 = sbr.rel (0) target = $region17
  $region16: #{a_call__.1} parent=0 // pred_region
    _
  $region17: #{a_call__.1} parent=0 // pred_fallthru
    _
  // Predicated region
  $region18: #{a_call__.1} parent=0 // pred_check
    _
  $region19: #{a_call__.1} parent=0 // pred_check_branch
    %215 = sbr.rel (0) target = $region21
  $region20: #{a_call__.1} parent=0 // pred_region
    _
  $region21: #{a_call__.1} parent=0 // pred_fallthru
    _

</llo_original>
